<compile_context>
chip_gen: v5e
topology: v5e:2x2
jax: 0.10.0
libtpu: 0.0.40
codegen_flags: <defaults>
</compile_context>

<pallas_src>
import jax
import jax.numpy as jnp
from jax.experimental import pallas as pl
from jax.experimental.pallas import tpu as pltpu


# ----------------------------------------------------------------------------
# Rarely-run path: fold Linear into per-item scores  (scores = table @ w.T + b)
# ----------------------------------------------------------------------------
def _score_kernel(table_ref, w_ref, b_ref, s_ref):
    """Per-item affine scores, emitted lane-dense.

    table_ref : VMEM [N, D]  (embedding table, native dtype, D on lanes)
    w_ref     : VMEM f32 [1, D]  (linear weight row)
    b_ref     : SMEM f32 [1, 1]  (linear bias, scalar path)
    s_ref     : VMEM f32 [1, N]  (scores, N on lanes)
    """
    table = table_ref[...].astype(jnp.float32)          # per-tile cast (VPU)
    w = w_ref[...]                                       # [1, D]
    # [1, D] x [N, D] contracted on D -> [1, N]; lane-dense result, no
    # 1-lane relayout on the MXU result path.
    scores = jax.lax.dot_general(
        w, table,
        dimension_numbers=(((1,), (1,)), ((), ())),
        preferred_element_type=jnp.float32,
    )
    s_ref[...] = scores + b_ref[0, 0]


def precompute_item_scores(emb_table, weight, bias):
    """emb_table: [N, D]; weight: [1, D]; bias: [1]  ->  scores row [1, N]."""
    N, D = emb_table.shape
    w_row = weight.reshape(1, D).astype(jnp.float32)
    b2d = bias.reshape(1, 1).astype(jnp.float32)
    return pl.pallas_call(
        _score_kernel,
        out_shape=jax.ShapeDtypeStruct((1, N), jnp.float32),
        in_specs=[
            pl.BlockSpec(memory_space=pltpu.MemorySpace.VMEM),   # table [N, D]
            pl.BlockSpec(memory_space=pltpu.MemorySpace.VMEM),   # weight [1, D]
            pl.BlockSpec(memory_space=pltpu.MemorySpace.SMEM),   # bias   [1, 1]
        ],
        out_specs=pl.BlockSpec(memory_space=pltpu.MemorySpace.VMEM),
    )(emb_table, w_row, b2d)


# ----------------------------------------------------------------------------
# Hot path: B-element gather from the score row + sigmoid
# ----------------------------------------------------------------------------
def _gather_sigmoid_kernel(idx_ref, s_ref, out_ref):
    """rating[b] = sigmoid(scores[idx[b]]).

    idx_ref : VMEM int32 [B, 1]  (item indices, B on sublanes)
    s_ref   : VMEM f32  [1, N]   (precomputed scores, N on lanes)
    out_ref : VMEM f32  [B, 1]   (ratings, PyTorch-shaped)
    """
    B = out_ref.shape[0]
    N = s_ref.shape[1]

    # Clamp OOB indices (PyTorch would raise; VMEM reads are unchecked).
    idx = jnp.clip(idx_ref[...], 0, N - 1)                       # [B, 1]

    # Transposed one-hot selection: sel[b, n] = (n == idx[b]).
    # N sits on the lane axis (64 of 128 lanes, one vreg at B=8) so the
    # compare / multiply / lane-reduce are lane-efficient.  (VPU + XLU only.)
    lane_ids = jax.lax.broadcasted_iota(jnp.int32, (B, N), 1)    # [B, N]
    sel = (lane_ids == idx).astype(jnp.float32)                  # exact 0/1

    # Gather-by-reduce: exactly one hit per row -> no extra rounding.
    logits = jnp.sum(sel * s_ref[...], axis=1, keepdims=True)    # [B, 1]

    out_ref[...] = jax.nn.sigmoid(logits)                        # EUP


def gather_sigmoid(item_indices, scores_row):
    """item_indices: int [B]; scores_row: [1, N]  ->  ratings (B, 1)."""
    B = item_indices.shape[0]
    idx_col = item_indices.astype(jnp.int32).reshape(B, 1)
    return pl.pallas_call(
        _gather_sigmoid_kernel,
        out_shape=jax.ShapeDtypeStruct((B, 1), jnp.float32),
        in_specs=[
            pl.BlockSpec(memory_space=pltpu.MemorySpace.VMEM),   # idx    [B, 1]
            pl.BlockSpec(memory_space=pltpu.MemorySpace.VMEM),   # scores [1, N]
        ],
        out_specs=pl.BlockSpec(memory_space=pltpu.MemorySpace.VMEM),
    )(idx_col, scores_row)


def mlp_forward(item_indices, emb_table, weight, bias):
    """Full forward matching the PyTorch module (embedding -> linear -> sigmoid).

    In a serving loop, `precompute_item_scores` should be called once per
    parameter set and its [1, N] result cached; only `gather_sigmoid` runs
    per request.
    """
    scores_row = precompute_item_scores(emb_table, weight, bias)
    return gather_sigmoid(item_indices, scores_row)


def mlp_reference(item_indices, emb_table, weight, bias):
    emb = emb_table[item_indices]                       # [B, D]
    logits = emb @ weight.T + bias                      # [B, 1]
    return jax.nn.sigmoid(logits)


if __name__ == "__main__":
    # config = {'num_items': 64, 'latent_dim': 32}
    num_items, latent_dim = 64, 32
    batch = 8

    key = jax.random.PRNGKey(0)
    k_emb, k_w, k_b, k_idx = jax.random.split(key, 4)

    # torch.nn.Embedding default init: N(0, 1)
    emb_table = jax.random.normal(k_emb, (num_items, latent_dim), jnp.float32)
    # torch.nn.Linear default init: U(-1/sqrt(in), 1/sqrt(in))
    bound = 1.0 / (latent_dim ** 0.5)
    weight = jax.random.uniform(k_w, (1, latent_dim), jnp.float32,
                                minval=-bound, maxval=bound)
    bias = jax.random.uniform(k_b, (1,), jnp.float32,
                              minval=-bound, maxval=bound)

    item_indices = jax.random.randint(k_idx, (batch,), 0, num_items, jnp.int32)

    rating = mlp_forward(item_indices, emb_table, weight, bias)
    rating = jax.block_until_ready(rating)

    ref = mlp_reference(item_indices, emb_table, weight, bias)
    assert rating.shape == (batch, 1)
    assert jnp.allclose(rating, ref, atol=1e-5, rtol=1e-5), (rating, ref)

    print("KERNEL_OK")
</pallas_src>

<mosaic_0001>
module attributes {stable_mosaic.version = 11 : i64} {
  func.func @_score_kernel(%arg0: memref<64x32xf32, #tpu.memory_space<vmem>>, %arg1: memref<1x32xf32, #tpu.memory_space<vmem>>, %arg2: memref<1x1xf32, #tpu.memory_space<smem>>, %arg3: memref<1x64xf32, #tpu.memory_space<vmem>>) attributes {dimension_semantics = [], scalar_prefetch = 0 : i64, scratch_operands = 0 : i64, tpu.core_type = #tpu.core_type<tc>} {
    %c0 = arith.constant 0 : index
    %c0_0 = arith.constant 0 : index
    %0 = vector.load %arg0[%c0, %c0_0] : memref<64x32xf32, #tpu.memory_space<vmem>>, vector<64x32xf32>
    %c0_1 = arith.constant 0 : index
    %c0_2 = arith.constant 0 : index
    %1 = vector.load %arg1[%c0_1, %c0_2] : memref<1x32xf32, #tpu.memory_space<vmem>>, vector<1x32xf32>
    %cst = arith.constant dense<0.000000e+00> : vector<1x64xf32>
    %2 = tpu.matmul %1, %0, %cst {dimension_numbers = #tpu.dot_dimension_numbers<[1], [1], [0], [0], [0, 0, 1, 0], [], []>} : vector<1x32xf32>, vector<64x32xf32>, vector<1x64xf32> -> vector<1x64xf32>
    %c0_3 = arith.constant 0 : index
    %c0_4 = arith.constant 0 : index
    %3 = memref.load %arg2[%c0_3, %c0_4] : memref<1x1xf32, #tpu.memory_space<smem>>
    %4 = vector.broadcast %3 : f32 to vector<1x64xf32>
    %5 = arith.addf %2, %4 : vector<1x64xf32>
    %c0_5 = arith.constant 0 : index
    %c0_6 = arith.constant 0 : index
    %6 = vector.load %arg3[%c0_5, %c0_6] : memref<1x64xf32, #tpu.memory_space<vmem>>, vector<1x64xf32>
    tpu.vector_store %arg3[%c0_5, %c0_6], %5 {strides = array<i32>} : memref<1x64xf32, #tpu.memory_space<vmem>>, vector<1x64xf32>,
    return
  }
}

</mosaic_0001>

<llo_original>
// kernel: tpu_custom_call.1
$region0: #{tpu_custom_call.1}
  #allocation0 [shape = 'u32[]', space=smem, size = 0x4, offset = 0x4, fixed_abs, tag = 'smem constant byte address 0x4 - core index']
  #allocation1 [shape = 'u32[72,128]{1,0:T(1,128)}', space=vmem, size = 0x9000, scoped, tag = 'internal scratch']
  #allocation2 [shape = 'f32[1,1]{1,0:T(1,128)S(6)}', space=smem, size = 0x200, scoped, tag = 'scoped memory for tpu_custom_call.1']
  %s0 = inlined_call_operand.vmem [shape: f32[64,32], index: 0, kind: input, shape index: {}]
  %s1 = inlined_call_operand.vmem [shape: f32[1,32], index: 1, kind: input, shape index: {}]
  %s2 = inlined_call_operand.<no memory space> [shape: f32[1,1], index: 2, kind: input, shape index: {}]
  %s3 = inlined_call_operand.hbm [shape: f32[1,64], index: 3, kind: output, shape index: {}]
  %s4 = sld [smem:[#allocation0]]
  $region22: #{tpu_custom_call.1} parent=0
    _
  %s6 = ssub.s32 1, %s4
  %s7 = scalar_select 0, %s6, %s4
  %8 = sst [smem:[#allocation2]] %s2
  $region1: #{tpu_custom_call.1} parent=0
    #allocation3 [shape = 'u8[512]{0}', space=vmem, size = 0x400, scoped, tag = 'output window, operand 0, single buffered']
    #allocation4 [shape = 's32[1]{0}', space=sflag, size = 0x4, scoped, tag = 'scoped memory for tpu_custom_call.1']
    %9 = vsyncpa [#allocation4], 0
    // Predicated region
    $region2: #{tpu_custom_call.1} parent=1 // pred_check
      _
    $region3: #{tpu_custom_call.1} parent=1 // pred_check_branch
      %11 = sbr.rel (0) target = $region5
    $region4: #{tpu_custom_call.1} parent=1 // pred_region
      _
    $region5: #{tpu_custom_call.1} parent=1 // pred_fallthru
      _
    // Predicated region
    $region6: #{tpu_custom_call.1} parent=1 // pred_check
      _
    $region7: #{tpu_custom_call.1} parent=1 // pred_check_branch
      %13 = sbr.rel (0) target = $region9
    $region8: #{tpu_custom_call.1} parent=1 // pred_region
      _
    $region9: #{tpu_custom_call.1} parent=1 // pred_fallthru
      _
    // Predicated region
    $region10: #{tpu_custom_call.1} parent=1 // pred_check
      _
    $region11: #{tpu_custom_call.1} parent=1 // pred_check_branch
      %15 = sbr.rel (0) target = $region13
    $region12: #{tpu_custom_call.1} parent=1 // pred_region
      _
    $region13: #{tpu_custom_call.1} parent=1 // pred_fallthru
      _
    %v16 = vld [vmem:[%s0] sm:$0xff]
    %v17 = vld [vmem:[%s0 + $0x8] sm:$0xff]
    %v18 = vld [vmem:[%s0 + $0x10] sm:$0xff]
    %v19 = vld [vmem:[%s0 + $0x18] sm:$0xff]
    %v20 = vld [vmem:[%s0 + $0x20] sm:$0xff]
    %v21 = vld [vmem:[%s0 + $0x28] sm:$0xff]
    %v22 = vld [vmem:[%s0 + $0x30] sm:$0xff]
    %v23 = vld [vmem:[%s0 + $0x38] sm:$0xff]
    %v24 = vld [vmem:[%s1] sm:$0x1]
    %s25 = sld [smem:[#allocation2]]
    %v26 = vstv %s25
    %vm27 = vcmask 261120
    %v29 = vsel %vm27, %v24, 0
    %v32 = vsel %vm27, %v16, 0
    %v35 = vsel %vm27, %v17, 0
    %v38 = vsel %vm27, %v18, 0
    %v41 = vsel %vm27, %v19, 0
    %v44 = vsel %vm27, %v20, 0
    %v47 = vsel %vm27, %v21, 0
    %v50 = vsel %vm27, %v22, 0
    %v53 = vsel %vm27, %v23, 0
    %55 = vmatpush.xpose.msra.mxu0 0.0
    %56 = vmatpush.xpose.msra.mxu0 0.0
    %57 = vmatpush.xpose.msra.mxu0 0.0
    %58 = vmatpush.xpose.msra.mxu0 0.0
    %59 = vmatpush.xpose.msra.mxu0 0.0
    %60 = vmatpush.xpose.msra.mxu0 0.0
    %61 = vmatpush.xpose.msra.mxu0 0.0
    %62 = vmatpush.xpose.msra.mxu0 0.0
    %63 = vmatpush.xpose.msra.mxu0 %v53
    %64 = vmatpush.xpose.msra.mxu0 %v50
    %65 = vmatpush.xpose.msra.mxu0 %v47
    %66 = vmatpush.xpose.msra.mxu0 %v44
    %67 = vmatpush.xpose.msra.mxu0 %v41
    %68 = vmatpush.xpose.msra.mxu0 %v38
    %69 = vmatpush.xpose.msra.mxu0 %v35
    %70 = vmatpush.xpose.msra.mxu0 %v32
    %71 = vmatmul.f32.gmra.mxu0 %v29
    %v72 = vpop.f32.mrf.mxu0
    %v73 = vadd.f32 %v26, %v72
    %74 = vdwg.mxu0
    %vm75 = vcmask 516096
    %76 = vst.msk [vmem:[#allocation3] sm:$0x1] %vm75, %v73
    // Predicated region
    $region14: #{tpu_custom_call.1} parent=1 // pred_check
      _
    $region15: #{tpu_custom_call.1} parent=1 // pred_check_branch
      %78 = sbr.rel (0) target = $region17
    $region16: #{tpu_custom_call.1} parent=1 // pred_region
      %80 = vsyncadd [#allocation4], 0
      %s82 = sshll.u32 [#allocation3], 4
      %s83 = int_to_ptr.vmem [resolvable:$true] %s82
      %s84 = sshll.u32 %s3, 4
      %s85 = int_to_ptr.hbm [resolvable:$true] %s84
      %87 = dma.vmem_to_hbm [thread:$0]  %s83, 16, %s85, [#allocation4]
    $region17: #{tpu_custom_call.1} parent=1 // pred_fallthru
      _
    // Predicated region
    $region18: #{tpu_custom_call.1} parent=1 // pred_check
      _
    $region19: #{tpu_custom_call.1} parent=1 // pred_check_branch
      %89 = sbr.rel (0) target = $region21
    $region20: #{tpu_custom_call.1} parent=1 // pred_region
      %91 = dma.done [#allocation4], 16
    $region21: #{tpu_custom_call.1} parent=1 // pred_fallthru
      _
    %92 = vsyncpa [#allocation4], 1

</llo_original>
